<compile_context>
chip_gen: v7x
topology: tpu7x:2x2x1
jax: 0.10.0
libtpu: 0.0.40
codegen_flags: <defaults>
</compile_context>

<pallas_src>
import math
import functools

import jax
import jax.numpy as jnp
from jax import lax
from jax.experimental import pallas as pl
from jax.experimental.pallas import tpu as pltpu


def make_positional_encoding_table(max_len: int, d_model: int, dtype=jnp.float32):
    """Plain-JAX parameter setup, mirrors the PyTorch __init__ buffer `pe`."""
    position = jnp.arange(max_len, dtype=jnp.float32)[:, None]              # [max_len, 1]
    div_term = jnp.exp(
        jnp.arange(0, d_model, 2, dtype=jnp.float32) * (-math.log(10000.0) / d_model)
    )                                                                        # [d_model//2]
    pe = jnp.zeros((max_len, d_model), dtype=jnp.float32)
    pe = pe.at[:, 0::2].set(jnp.sin(position * div_term))
    pe = pe.at[:, 1::2].set(jnp.cos(position * div_term))
    return pe.astype(dtype)                                                  # [max_len, D]


def _pos_enc_kernel(seed_ref, x_ref, pe_ref, o_ref, *, p: float, batch: int, ts: int):
    # x_ref : (ts, B*D) lane-dense tile of the input (sequence rows x flattened B*D)
    # pe_ref: (ts, D)   tile of the PE table, already in x.dtype
    x = x_ref[...]
    pe = pe_ref[...]
    if batch > 1:
        # Replicate PE over the batch along lanes: column b*D + d <- pe[:, d].
        pe = jnp.tile(pe, (1, batch))
    y = x + pe

    if p > 0.0:
        # Inverted dropout with a stateless counter-based hash RNG.
        # NOTE: Bernoulli keep-mask + 1/(1-p) rescale matches torch dropout
        # semantics, but not torch's exact RNG stream.
        bd = x.shape[1]
        rows = lax.broadcasted_iota(jnp.int32, x.shape, 0)
        cols = lax.broadcasted_iota(jnp.int32, x.shape, 1)
        idx = (pl.program_id(0) * ts + rows) * bd + cols          # global element id
        # splitmix32 / murmur-style finalizer (int32 wrap-around arithmetic).
        h = idx ^ (seed_ref[0] * jnp.int32(-1640531527))                      # 0x9E3779B9
        h = (h ^ lax.shift_right_logical(h, 16)) * jnp.int32(-2048144789)     # 0x85EBCA6B
        h = (h ^ lax.shift_right_logical(h, 13)) * jnp.int32(-1028477387)     # 0xC2B2AE35
        h = h ^ lax.shift_right_logical(h, 16)
        bits24 = lax.shift_right_logical(h, 8)                    # uniform in [0, 2^24)
        thresh = jnp.int32(int(round(p * float(1 << 24))))        # no int32 overflow for p<1
        keep = bits24 >= thresh
        scale = jnp.asarray(1.0 / (1.0 - p), dtype=y.dtype)
        y = jnp.where(keep, y * scale, jnp.zeros_like(y))

    o_ref[...] = y.astype(o_ref.dtype)


def positional_encoding(x, pe_table, *, p: float = 0.1, seed: int = 0, ts: int | None = None):
    """x: [S, B, D], pe_table: [max_len, D]  ->  [S, B, D]"""
    S, B, D = x.shape
    assert pe_table.shape[0] >= S and pe_table.shape[1] == D
    assert 0.0 <= p < 1.0, "dropout p must be in [0, 1)"
    BD = B * D
    itemsize = jnp.dtype(x.dtype).itemsize

    # Glue (plain JAX): slice + hoist the dtype cast out of the kernel,
    # and present the kernel with a lane-dense 2-D view of x.
    pe = pe_table[:S].astype(x.dtype)
    x2 = x.reshape(S, BD)

    # Bounded sequence tile: ~2 MiB of x per grid step -> multi-step grid with
    # DMA/compute overlap; comfortably double-buffers within every generation's
    # scoped VMEM (incl. v7x's 64 MiB physical VMEM).
    if ts is None:
        target_bytes = 2 << 20
        ts = max(1, target_bytes // (BD * itemsize))
        ts = max(8, (ts // 8) * 8)          # keep sublanes full / (8,128)-friendly
    ts = int(min(ts, S))
    grid = (pl.cdiv(S, ts),)

    tile_bytes = ts * BD * itemsize
    vmem_limit = int(min(48 << 20, max(16 << 20, 6 * tile_bytes)))

    cost = pl.CostEstimate(
        flops=5 * S * BD,                                    # add + dropout select/scale
        bytes_accessed=(2 * S * BD + S * D) * itemsize,      # read x, write y, read pe
        transcendentals=0,
    )

    seed_arr = jnp.array([seed], dtype=jnp.int32)
    kernel = functools.partial(_pos_enc_kernel, p=float(p), batch=B, ts=ts)

    out2 = pl.pallas_call(
        kernel,
        out_shape=jax.ShapeDtypeStruct((S, BD), x.dtype),
        grid_spec=pltpu.PrefetchScalarGridSpec(
            num_scalar_prefetch=1,
            grid=grid,
            in_specs=[
                pl.BlockSpec((ts, BD), lambda i, seed: (i, 0)),   # x tile
                pl.BlockSpec((ts, D), lambda i, seed: (i, 0)),    # pe tile
            ],
            out_specs=pl.BlockSpec((ts, BD), lambda i, seed: (i, 0)),
        ),
        compiler_params=pltpu.CompilerParams(
            dimension_semantics=("parallel",),   # hash RNG is order-independent
            vmem_limit_bytes=vmem_limit,
        ),
        cost_estimate=cost,
    )(seed_arr, x2, pe)

    return out2.reshape(S, B, D)


if __name__ == "__main__":
    S, B, D = 8, 2, 32
    MAX_LEN = 64

    key = jax.random.PRNGKey(0)
    x = jax.random.normal(key, (S, B, D), dtype=jnp.float32)
    pe_table = make_positional_encoding_table(MAX_LEN, D, dtype=jnp.float32)

    # Eval-mode path (p=0 -> identity dropout): check the PE add vs reference.
    out_eval = positional_encoding(x, pe_table, p=0.0)
    jax.block_until_ready(out_eval)
    ref = x + pe_table[:S][:, None, :]
    assert jnp.allclose(out_eval, ref, atol=1e-6, rtol=1e-6), "mismatch vs reference add"

    # Training-mode forward (dropout p=0.1) with a deterministic seed.
    out_train = positional_encoding(x, pe_table, p=0.1, seed=0)
    jax.block_until_ready(out_train)
    assert out_train.shape == (S, B, D)
    # Every element is either dropped (0) or (x+pe)/(1-p).
    scaled = ref / (1.0 - 0.1)
    ok = jnp.isclose(out_train, scaled, atol=1e-5, rtol=1e-5) | (out_train == 0.0)
    assert bool(jnp.all(ok)), "dropout output not consistent with keep/scale semantics"

    print("KERNEL_OK")
</pallas_src>

<mosaic_0001>
module attributes {stable_mosaic.version = 11 : i64} {
  func.func @_pos_enc_kernel(%arg0: i32, %arg1: memref<1xi32, #tpu.memory_space<smem>>, %arg2: memref<8x64xf32, #tpu.memory_space<vmem>>, %arg3: memref<8x32xf32, #tpu.memory_space<vmem>>, %arg4: memref<8x64xf32, #tpu.memory_space<vmem>>) attributes {dimension_semantics = [#tpu.dimension_semantics<parallel>], iteration_bounds = array<i64: 1>, scalar_prefetch = 1 : i64, scratch_operands = 0 : i64, tpu.core_type = #tpu.core_type<tc>, window_params = [{transform_indices = @transform_0, window_bounds = array<i64: 8, 64>}, {transform_indices = @transform_1, window_bounds = array<i64: 8, 32>}, {transform_indices = @transform_2, window_bounds = array<i64: 8, 64>}]} {
    %c0 = arith.constant 0 : index
    %c0_0 = arith.constant 0 : index
    %0 = vector.load %arg2[%c0, %c0_0] : memref<8x64xf32, #tpu.memory_space<vmem>>, vector<8x64xf32>
    %c0_1 = arith.constant 0 : index
    %c0_2 = arith.constant 0 : index
    %1 = vector.load %arg3[%c0_1, %c0_2] : memref<8x32xf32, #tpu.memory_space<vmem>>, vector<8x32xf32>
    %2 = tpu.concatenate %1, %1 in 1 : vector<8x32xf32>, vector<8x32xf32> -> vector<8x64xf32>
    %3 = arith.addf %0, %2 : vector<8x64xf32>
    %c0_3 = arith.constant 0 : index
    %c0_4 = arith.constant 0 : index
    %4 = vector.load %arg4[%c0_3, %c0_4] : memref<8x64xf32, #tpu.memory_space<vmem>>, vector<8x64xf32>
    tpu.vector_store %arg4[%c0_3, %c0_4], %3 {strides = array<i32>} : memref<8x64xf32, #tpu.memory_space<vmem>>, vector<8x64xf32>,
    return
  }
  func.func @transform_0(%arg0: i32, %arg1: memref<1xi32, #tpu.memory_space<smem>>) -> (i32, i32) {
    %c0_i32 = arith.constant 0 : i32
    %c0_i32_0 = arith.constant 0 : i32
    return %arg0, %c0_i32 : i32, i32
  }
  func.func @transform_1(%arg0: i32, %arg1: memref<1xi32, #tpu.memory_space<smem>>) -> (i32, i32) {
    %c0_i32 = arith.constant 0 : i32
    %c0_i32_0 = arith.constant 0 : i32
    return %arg0, %c0_i32 : i32, i32
  }
  func.func @transform_2(%arg0: i32, %arg1: memref<1xi32, #tpu.memory_space<smem>>) -> (i32, i32) {
    %c0_i32 = arith.constant 0 : i32
    %c0_i32_0 = arith.constant 0 : i32
    return %arg0, %c0_i32 : i32, i32
  }
}

</mosaic_0001>

<llo_original>
// kernel: tpu_custom_call.1
$region0: #{tpu_custom_call.1}
  #allocation0 [shape = 'u32[]', space=smem, size = 0x4, offset = 0x4, fixed_abs, tag = 'smem constant byte address 0x4 - core index']
  #allocation1 [shape = 'u32[144,128]{1,0:T(1,128)}', space=vmem, size = 0x12000, scoped, tag = 'internal scratch']
  #allocation2 [shape = 's32[1]{0}', space=sflag, size = 0x4, scoped, tag = 'scoped memory for tpu_custom_call.1']
  #allocation3 [shape = 's32[1]{0:T(128)S(6)}', space=smem, size = 0x200, scoped, tag = 'prefetched SMEM operand 0']
  %s0 = inlined_call_operand.<no memory space> [shape: s32[1], index: 0, kind: input, shape index: {}]
  %s1 = inlined_call_operand.hbm [shape: f32[8,64], index: 1, kind: input, shape index: {}]
  %s2 = inlined_call_operand.hbm [shape: f32[8,32], index: 2, kind: input, shape index: {}]
  %s3 = inlined_call_operand.hbm [shape: f32[8,64], index: 3, kind: output, shape index: {}]
  %s4 = sld [smem:[#allocation0]]
  $region26: #{tpu_custom_call.1} parent=0
    _
  %s6 = ssub.s32 1, %s4
  %s7 = scalar_select 0, %s6, %s4
  %8 = sst [smem:[#allocation3]] %s0
  $region1: #{tpu_custom_call.1} parent=0
    #allocation4 [shape = 'u8[4096]{0}', space=vmem, size = 0x1000, scoped, tag = 'input window, operand 1, single buffered']
    #allocation5 [shape = 's32[1]{0}', space=sflag, size = 0x4, scoped, tag = 'scoped memory for tpu_custom_call.1']
    #allocation6 [shape = 's32[1]{0}', space=sflag, size = 0x4, scoped, tag = 'scoped memory for tpu_custom_call.1']
    #allocation7 [shape = 'u8[4096]{0}', space=vmem, size = 0x1000, scoped, tag = 'input window, operand 2, single buffered']
    #allocation8 [shape = 's32[1]{0}', space=sflag, size = 0x4, scoped, tag = 'scoped memory for tpu_custom_call.1']
    #allocation9 [shape = 'u8[4096]{0}', space=vmem, size = 0x1000, scoped, tag = 'output window, operand 0, single buffered']
    %9 = vsyncpa [#allocation5], 0
    %10 = vsyncpa [#allocation8], 0
    %11 = vsyncpa [#allocation6], 0
    // Predicated region
    $region2: #{tpu_custom_call.1} parent=1 // pred_check
      _
    $region3: #{tpu_custom_call.1} parent=1 // pred_check_branch
      %13 = sbr.rel (0) target = $region5
    $region4: #{tpu_custom_call.1} parent=1 // pred_region
      %s15 = ssub.s32 128, 128
      %16 = vsyncadd [#allocation5], %s15
      %s18 = sshll.u32 [#allocation4], 4
      %s19 = int_to_ptr.vmem [resolvable:$true] %s18
      %21 = dma.hbm_to_vmem [thread:$0]  %s1, 128, %s19, [#allocation5]
    $region5: #{tpu_custom_call.1} parent=1 // pred_fallthru
      _
    // Predicated region
    $region6: #{tpu_custom_call.1} parent=1 // pred_check
      _
    $region7: #{tpu_custom_call.1} parent=1 // pred_check_branch
      %23 = sbr.rel (0) target = $region9
    $region8: #{tpu_custom_call.1} parent=1 // pred_region
      %s25 = ssub.s32 128, 128
      %26 = vsyncadd [#allocation8], %s25
      %s28 = sshll.u32 [#allocation7], 4
      %s29 = int_to_ptr.vmem [resolvable:$true] %s28
      %31 = dma.hbm_to_vmem [thread:$0]  %s2, 128, %s29, [#allocation8]
    $region9: #{tpu_custom_call.1} parent=1 // pred_fallthru
      _
    // Predicated region
    $region10: #{tpu_custom_call.1} parent=1 // pred_check
      _
    $region11: #{tpu_custom_call.1} parent=1 // pred_check_branch
      %33 = sbr.rel (0) target = $region13
    $region12: #{tpu_custom_call.1} parent=1 // pred_region
      %34 = dma.done [#allocation5], 128
    $region13: #{tpu_custom_call.1} parent=1 // pred_fallthru
      _
    // Predicated region
    $region14: #{tpu_custom_call.1} parent=1 // pred_check
      _
    $region15: #{tpu_custom_call.1} parent=1 // pred_check_branch
      %36 = sbr.rel (0) target = $region17
    $region16: #{tpu_custom_call.1} parent=1 // pred_region
      %37 = dma.done [#allocation8], 128
    $region17: #{tpu_custom_call.1} parent=1 // pred_fallthru
      _
    %v38 = vld [vmem:[#allocation4] sm:$0xff]
    %v39 = vld [vmem:[#allocation7] sm:$0xff]
    %41 = vrot.lane.b32.xlu0 %v39, 32
    %v42 = vpop.permute.xlu0 %41
    %vm44 = vcmask 261120
    %v45 = vsel %vm44, %v39, %v42
    %v46 = vadd.f32 %v38, %v45
    %vm47 = vcmask 523264
    %48 = vst.msk [vmem:[#allocation9] sm:$0xff] %vm47, %v46
    // Predicated region
    $region18: #{tpu_custom_call.1} parent=1 // pred_check
      _
    $region19: #{tpu_custom_call.1} parent=1 // pred_check_branch
      %50 = sbr.rel (0) target = $region21
    $region20: #{tpu_custom_call.1} parent=1 // pred_region
      %s52 = ssub.s32 128, 128
      %53 = vsyncadd [#allocation6], %s52
      %s55 = sshll.u32 [#allocation9], 4
      %s56 = int_to_ptr.vmem [resolvable:$true] %s55
      %58 = dma.vmem_to_hbm [thread:$0]  %s56, 128, %s3, [#allocation6]
    $region21: #{tpu_custom_call.1} parent=1 // pred_fallthru
      _
    // Predicated region
    $region22: #{tpu_custom_call.1} parent=1 // pred_check
      _
    $region23: #{tpu_custom_call.1} parent=1 // pred_check_branch
      %60 = sbr.rel (0) target = $region25
    $region24: #{tpu_custom_call.1} parent=1 // pred_region
      %61 = dma.done [#allocation6], 128
    $region25: #{tpu_custom_call.1} parent=1 // pred_fallthru
      _
    %62 = vsyncpa [#allocation5], 1
    %63 = vsyncpa [#allocation8], 1
    %64 = vsyncpa [#allocation6], 1

</llo_original>
